<compile_context>
chip_gen: v7x
topology: tpu7x:2x2x1
jax: 0.10.0
libtpu: 0.0.40
codegen_flags: <defaults>
</compile_context>

<pallas_src>
import jax
import jax.numpy as jnp
from jax.experimental import pallas as pl
from jax.experimental.pallas import tpu as pltpu


LANE_COLS = 512          # lane-dense column width (multiple of 128)
MAX_TILE_ROWS = 512      # rows per grid step -> 512*512*4B = 1 MiB per f32 buffer
MIN_PALLAS_ELEMS = 1 << 16  # below this, XLA-fused 2*x beats kernel launch cost


def _residual_block_kernel(x_ref, o_ref):
    # blocks(x) + shortcut(x), both Identity  ->  x + x  (one load, one VPU op,
    # one store per vreg: already the floor for this mem-bound op).
    o_ref[...] = x_ref[...] * 2


def _pallas_double_2d(x2d):
    """Tiled, pipelined 2*x over a lane-dense (M, LANE_COLS) slab."""
    m, n = x2d.shape
    tile_m = m if m <= MAX_TILE_ROWS else MAX_TILE_ROWS
    grid = (m // tile_m,)
    return pl.pallas_call(
        _residual_block_kernel,
        out_shape=jax.ShapeDtypeStruct((m, n), x2d.dtype),
        grid_spec=pl.GridSpec(
            grid=grid,
            in_specs=[pl.BlockSpec((tile_m, n), lambda i: (i, 0))],
            out_specs=pl.BlockSpec((tile_m, n), lambda i: (i, 0)),
        ),
        compiler_params=pltpu.CompilerParams(
            # Independent grid steps: lets v7x shard across its 2 TensorCores;
            # neutral on single-TC v5e/v6e.
            dimension_semantics=("parallel",),
        ),
    )(x2d)


def residual_block_forward(x, in_channels, out_channels, *, use_pallas=None):
    """Pallas implementation of ResidualBlock.forward (out = 2*x).

    The wrapper reshapes to a lane-dense 2D layout (free layout plumbing),
    runs the tiled Pallas kernel, and reshapes back to the original NCHW shape.
    """
    assert x.shape[1] == in_channels, "channel dim mismatch with in_channels"
    del out_channels  # shortcut is Identity either way; semantics unchanged

    n_elems = x.size
    if use_pallas is None:
        use_pallas = n_elems >= MIN_PALLAS_ELEMS
    if not use_pallas:
        # Tiny input: pallas_call fixed overhead dwarfs the op; let XLA fuse it.
        return x + x

    # Flatten to a lane-dense 2D slab: (rows, 512), padding the tail if needed.
    flat = x.reshape(-1)
    rows = -(-n_elems // LANE_COLS)  # ceil div
    if rows > MAX_TILE_ROWS:
        # Round rows up so the tiled grid divides evenly.
        rows = -(-rows // MAX_TILE_ROWS) * MAX_TILE_ROWS
    padded = rows * LANE_COLS
    if padded != n_elems:
        flat = jnp.pad(flat, (0, padded - n_elems))
    x2d = flat.reshape(rows, LANE_COLS)

    out2d = _pallas_double_2d(x2d)

    out = out2d.reshape(-1)
    if padded != n_elems:
        out = out[:n_elems]
    return out.reshape(x.shape)


if __name__ == "__main__":
    key = jax.random.PRNGKey(0)
    batch, in_channels, out_channels, spatial = 2, 4, 4, 16
    x = jax.random.normal(
        key, (batch, in_channels, spatial, spatial), dtype=jnp.float32
    )

    # Force the Pallas path on the small test shape so the kernel is exercised.
    out = residual_block_forward(x, in_channels, out_channels, use_pallas=True)
    out = jax.block_until_ready(out)
    ref = x + x
    assert out.shape == x.shape
    assert jnp.allclose(out, ref, atol=1e-6, rtol=1e-6)

    # Larger input: exercises the multi-step tiled grid + auto dispatch.
    xl = jax.random.normal(jax.random.PRNGKey(1), (8, 32, 64, 64), jnp.float32)
    outl = jax.block_until_ready(residual_block_forward(xl, 32, 32))
    assert outl.shape == xl.shape
    assert jnp.allclose(outl, xl + xl, atol=1e-6, rtol=1e-6)

    print("KERNEL_OK")
</pallas_src>

<mosaic_0001>
module attributes {stable_mosaic.version = 11 : i64} {
  func.func @_residual_block_kernel(%arg0: i32, %arg1: memref<4x512xf32, #tpu.memory_space<vmem>>, %arg2: memref<4x512xf32, #tpu.memory_space<vmem>>) attributes {dimension_semantics = [#tpu.dimension_semantics<parallel>], iteration_bounds = array<i64: 1>, scalar_prefetch = 0 : i64, scratch_operands = 0 : i64, tpu.core_type = #tpu.core_type<tc>, window_params = [{transform_indices = @transform_0, window_bounds = array<i64: 4, 512>}, {transform_indices = @transform_1, window_bounds = array<i64: 4, 512>}]} {
    %c0 = arith.constant 0 : index
    %c0_0 = arith.constant 0 : index
    %0 = vector.load %arg1[%c0, %c0_0] : memref<4x512xf32, #tpu.memory_space<vmem>>, vector<4x512xf32>
    %cst = arith.constant 2.000000e+00 : f32
    %1 = vector.broadcast %cst : f32 to vector<4x512xf32>
    %2 = arith.mulf %0, %1 : vector<4x512xf32>
    %c0_1 = arith.constant 0 : index
    %c0_2 = arith.constant 0 : index
    %3 = vector.load %arg2[%c0_1, %c0_2] : memref<4x512xf32, #tpu.memory_space<vmem>>, vector<4x512xf32>
    tpu.vector_store %arg2[%c0_1, %c0_2], %2 {strides = array<i32>} : memref<4x512xf32, #tpu.memory_space<vmem>>, vector<4x512xf32>,
    return
  }
  func.func @transform_0(%arg0: i32) -> (i32, i32) {
    %c0_i32 = arith.constant 0 : i32
    %c0_i32_0 = arith.constant 0 : i32
    return %arg0, %c0_i32 : i32, i32
  }
  func.func @transform_1(%arg0: i32) -> (i32, i32) {
    %c0_i32 = arith.constant 0 : i32
    %c0_i32_0 = arith.constant 0 : i32
    return %arg0, %c0_i32 : i32, i32
  }
}

</mosaic_0001>

<llo_original>
// kernel: tpu_custom_call.1
$region0: #{tpu_custom_call.1}
  #allocation0 [shape = 'u32[]', space=smem, size = 0x4, offset = 0x4, fixed_abs, tag = 'smem constant byte address 0x4 - core index']
  #allocation1 [shape = 'u32[144,128]{1,0:T(1,128)}', space=vmem, size = 0x12000, scoped, tag = 'internal scratch']
  %s0 = inlined_call_operand.hbm [shape: f32[4,512], index: 0, kind: input, shape index: {}]
  %s1 = inlined_call_operand.hbm [shape: f32[4,512], index: 1, kind: output, shape index: {}]
  %s2 = sld [smem:[#allocation0]]
  $region18: #{tpu_custom_call.1} parent=0
    _
  %s4 = ssub.s32 1, %s2
  %s5 = scalar_select 0, %s4, %s2
  $region1: #{tpu_custom_call.1} parent=0
    #allocation2 [shape = 'u8[8192]{0}', space=vmem, size = 0x2000, scoped, tag = 'input window, operand 0, single buffered']
    #allocation3 [shape = 's32[1]{0}', space=sflag, size = 0x4, scoped, tag = 'scoped memory for tpu_custom_call.1']
    #allocation4 [shape = 's32[1]{0}', space=sflag, size = 0x4, scoped, tag = 'scoped memory for tpu_custom_call.1']
    #allocation5 [shape = 'u8[8192]{0}', space=vmem, size = 0x2000, scoped, tag = 'output window, operand 0, single buffered']
    %6 = vsyncpa [#allocation3], 0
    %7 = vsyncpa [#allocation4], 0
    // Predicated region
    $region2: #{tpu_custom_call.1} parent=1 // pred_check
      _
    $region3: #{tpu_custom_call.1} parent=1 // pred_check_branch
      %9 = sbr.rel (0) target = $region5
    $region4: #{tpu_custom_call.1} parent=1 // pred_region
      %s11 = ssub.s32 256, 256
      %12 = vsyncadd [#allocation3], %s11
      %s14 = sshll.u32 [#allocation2], 4
      %s15 = int_to_ptr.vmem [resolvable:$true] %s14
      %17 = dma.hbm_to_vmem [thread:$0]  %s0, 256, %s15, [#allocation3]
    $region5: #{tpu_custom_call.1} parent=1 // pred_fallthru
      _
    // Predicated region
    $region6: #{tpu_custom_call.1} parent=1 // pred_check
      _
    $region7: #{tpu_custom_call.1} parent=1 // pred_check_branch
      %19 = sbr.rel (0) target = $region9
    $region8: #{tpu_custom_call.1} parent=1 // pred_region
      %20 = dma.done [#allocation3], 256
    $region9: #{tpu_custom_call.1} parent=1 // pred_fallthru
      _
    %v21 = vld [vmem:[#allocation2] sm:$0xff]
    %v22 = vld [vmem:[#allocation2 + $0x8] sm:$0xff]
    %v23 = vmul.f32 %v21, 2.0
    %v24 = vmul.f32 %v22, 2.0
    %25 = vst [vmem:[#allocation5] sm:$0xff] %v23
    %26 = vst [vmem:[#allocation5 + $0x8] sm:$0xff] %v24
    // Predicated region
    $region10: #{tpu_custom_call.1} parent=1 // pred_check
      _
    $region11: #{tpu_custom_call.1} parent=1 // pred_check_branch
      %28 = sbr.rel (0) target = $region13
    $region12: #{tpu_custom_call.1} parent=1 // pred_region
      %s30 = ssub.s32 256, 256
      %31 = vsyncadd [#allocation4], %s30
      %s33 = sshll.u32 [#allocation5], 4
      %s34 = int_to_ptr.vmem [resolvable:$true] %s33
      %36 = dma.vmem_to_hbm [thread:$0]  %s34, 256, %s1, [#allocation4]
    $region13: #{tpu_custom_call.1} parent=1 // pred_fallthru
      _
    // Predicated region
    $region14: #{tpu_custom_call.1} parent=1 // pred_check
      _
    $region15: #{tpu_custom_call.1} parent=1 // pred_check_branch
      %38 = sbr.rel (0) target = $region17
    $region16: #{tpu_custom_call.1} parent=1 // pred_region
      %39 = dma.done [#allocation4], 256
    $region17: #{tpu_custom_call.1} parent=1 // pred_fallthru
      _
    %40 = vsyncpa [#allocation3], 1
    %41 = vsyncpa [#allocation4], 1

</llo_original>
